<compile_context>
chip_gen: v7x
topology: tpu7x:2x2x1
jax: 0.10.0
libtpu: 0.0.40
codegen_flags: <defaults>
</compile_context>

<pallas_src>
import functools

import numpy as np

import jax
import jax.numpy as jnp
from jax.experimental import pallas as pl
from jax.experimental.pallas import tpu as pltpu


# ----------------------------------------------------------------------------- kernel
def johns_block_kernel(x_ref, wpack_ref, vec_ref, o_ref, *, num_heads, ff_dim):
    N, E = x_ref.shape                       # N = S * B  (rows), E = embed dim
    F = ff_dim
    H = num_heads
    Dh = E // H
    HN = H * N

    x = x_ref[...].astype(jnp.float32)       # (N, E) f32

    # --- packed bf16 weights: one operand, static aligned sub-slices ---
    wqkv = wpack_ref[0:E, 0:3 * E]           # (E, 3E)  (Q cols pre-scaled by 1/sqrt(Dh))
    wo   = wpack_ref[E:2 * E, 0:E]           # (E, E)
    w1   = wpack_ref[2 * E:3 * E, 0:F]       # (E, F)
    w2   = wpack_ref[3 * E:3 * E + F, 0:E]   # (F, E)

    # --- packed f32 vectors (row layout fixed in prepare_params) ---
    vecs = vec_ref[...]
    bqkv = vecs[0:1, 0:3 * E]                # (1, 3E)  (Q part pre-scaled)
    bo   = vecs[1:2, 0:E]
    g1   = vecs[2:3, 0:E]
    be1  = vecs[3:4, 0:E]
    b1   = vecs[4:5, 0:F]
    b2   = vecs[5:6, 0:E]
    g2   = vecs[6:7, 0:E]
    be2  = vecs[7:8, 0:E]
    bid_q = vecs[8:8 + N, 0:1]               # (N, 1) batch id of each query row
    bid_k = vecs[8 + N:9 + N, 0:N]           # (1, N) batch id of each key column

    # --- fused QKV projection: one MXU matmul, bf16 in / f32 accumulate ---
    qkv = jnp.dot(x.astype(jnp.bfloat16), wqkv,
                  preferred_element_type=jnp.float32) + bqkv       # (N, 3E) f32
    q = qkv[:, 0:E]
    k = qkv[:, E:2 * E]
    v = qkv[:, 2 * E:3 * E]
    kT = k.T.astype(jnp.bfloat16)            # (E, N) — ONE hoisted transpose

    # --- head lane masks, built once (no per-head re-trace) ---
    lane = jax.lax.broadcasted_iota(jnp.int32, (N, E), 1)
    hm = jnp.concatenate(
        [jnp.where((lane >= h * Dh) & (lane < (h + 1) * Dh), 1.0, 0.0)
         for h in range(H)], axis=0)         # (HN, E) f32, block h masks its lanes

    # --- stacked-heads attention: ONE score matmul / softmax / context matmul ---
    q_st = (jnp.concatenate([q] * H, axis=0) * hm).astype(jnp.bfloat16)   # (HN, E)
    s = jnp.dot(q_st, kT, preferred_element_type=jnp.float32)             # (HN, N)
    # same-batch mask: query-row batch id vs key-column batch id (f32 exact ints)
    same = jnp.concatenate([bid_q] * H, axis=0) == bid_k                  # (HN, N)
    s = jnp.where(same, s, -1e30)            # cross-batch keys masked (f32 path)
    m = jnp.max(s, axis=-1, keepdims=True)
    e = jnp.exp(s - m)
    p = e * pl.reciprocal(jnp.sum(e, axis=-1, keepdims=True), approx=True)
    ctx_st = jnp.dot(p.astype(jnp.bfloat16), v.astype(jnp.bfloat16),
                     preferred_element_type=jnp.float32)                  # (HN, E)
    ctx_st = ctx_st * hm                     # keep only head-h lanes in row block h
    ctx = ctx_st[0:N, :]                     # heads occupy disjoint lanes -> sum == concat
    for h in range(1, H):
        ctx = ctx + ctx_st[h * N:(h + 1) * N, :]

    attn_out = jnp.dot(ctx.astype(jnp.bfloat16), wo,
                       preferred_element_type=jnp.float32) + bo           # (N, E)

    def layer_norm(z, gamma, beta):
        mu = jnp.mean(z, axis=-1, keepdims=True)
        var = jnp.mean((z - mu) ** 2, axis=-1, keepdims=True)
        return (z - mu) * jax.lax.rsqrt(var + 1e-5) * gamma + beta

    # TODO(synk): dropout is eval-mode identity here; training-mode dropout would
    #             use pltpu.prng_seed + pltpu.stateful_bernoulli.
    y = layer_norm(x + attn_out, g1, be1)

    # --- FFN: Linear -> ReLU -> Linear (bf16 MXU inputs, f32 accumulate) ---
    h1 = jnp.maximum(jnp.dot(y.astype(jnp.bfloat16), w1,
                             preferred_element_type=jnp.float32) + b1, 0.0)
    ffn = jnp.dot(h1.astype(jnp.bfloat16), w2,
                  preferred_element_type=jnp.float32) + b2

    out = layer_norm(y + ffn, g2, be2)
    o_ref[...] = out.astype(o_ref.dtype)


# ----------------------------------------------------------------------------- params
def init_params(key, embed_dim, num_heads, ff_dim):
    del num_heads
    ks = jax.random.split(key, 4)
    E, F = embed_dim, ff_dim
    return {
        "wqkv": jax.random.normal(ks[0], (E, 3 * E), jnp.float32) * 0.05,
        "bqkv": jnp.zeros((1, 3 * E), jnp.float32),
        "wo":   jax.random.normal(ks[1], (E, E), jnp.float32) * 0.05,
        "bo":   jnp.zeros((1, E), jnp.float32),
        "g1":   jnp.ones((1, E), jnp.float32),
        "be1":  jnp.zeros((1, E), jnp.float32),
        "w1":   jax.random.normal(ks[2], (E, F), jnp.float32) * 0.05,
        "b1":   jnp.zeros((1, F), jnp.float32),
        "w2":   jax.random.normal(ks[3], (F, E), jnp.float32) * 0.05,
        "b2":   jnp.zeros((1, E), jnp.float32),
        "g2":   jnp.ones((1, E), jnp.float32),
        "be2":  jnp.zeros((1, E), jnp.float32),
    }


def prepare_params(params, num_heads, seq_len, batch):
    """Host-side prep (runs once): fold 1/sqrt(Dh) into the Q projection, pack
    the four weight matrices into ONE bf16 block and the small vectors plus
    per-row batch ids into ONE f32 block."""
    E = int(params["wo"].shape[0])
    F = int(params["w1"].shape[1])
    N = seq_len * batch
    Dh = E // num_heads
    scale = 1.0 / float(np.sqrt(Dh))

    wqkv = np.asarray(params["wqkv"], np.float32).copy()
    bqkv = np.asarray(params["bqkv"], np.float32).copy()
    wqkv[:, :E] *= scale                      # fold softmax scale into Q columns
    bqkv[:, :E] *= scale

    # ---- one bf16 weight block: rows [wqkv | wo | w1 | w2], lanes padded to 128 ----
    mats = [wqkv,
            np.asarray(params["wo"], np.float32),
            np.asarray(params["w1"], np.float32),
            np.asarray(params["w2"], np.float32)]
    w_width = max(int(m.shape[1]) for m in mats)
    w_width = ((w_width + 127) // 128) * 128
    w_rows = sum(int(m.shape[0]) for m in mats)
    w_rows = ((w_rows + 15) // 16) * 16       # bf16 sublane-tile alignment
    wpack = np.zeros((w_rows, w_width), np.float32)
    off = 0
    for m in mats:
        r, c = m.shape
        wpack[off:off + r, :c] = m
        off += r

    # ---- one f32 vector block: 8 bias/gamma/beta rows + batch-id rows ----
    rows = [bqkv[0],
            np.asarray(params["bo"], np.float32)[0],
            np.asarray(params["g1"], np.float32)[0],
            np.asarray(params["be1"], np.float32)[0],
            np.asarray(params["b1"], np.float32)[0],
            np.asarray(params["b2"], np.float32)[0],
            np.asarray(params["g2"], np.float32)[0],
            np.asarray(params["be2"], np.float32)[0]]
    v_width = max(max(int(r.shape[0]) for r in rows), N)
    v_width = ((v_width + 127) // 128) * 128
    v_rows = ((8 + N + 1 + 7) // 8) * 8
    vec = np.zeros((v_rows, v_width), np.float32)
    for i, r in enumerate(rows):
        vec[i, :r.shape[0]] = r
    bid = (np.arange(N, dtype=np.int64) % batch).astype(np.float32)  # row n = s*B+b -> b
    vec[8:8 + N, 0] = bid        # query-row batch ids (column layout -> (N,1) slice)
    vec[8 + N, :N] = bid         # key-col  batch ids (row layout    -> (1,N) slice)

    return {"wpack": jnp.asarray(wpack, jnp.bfloat16),
            "vec": jnp.asarray(vec, jnp.float32)}


# ----------------------------------------------------------------------------- wrapper
@functools.partial(jax.jit, static_argnames=("num_heads", "ff_dim"))
def johns_nn_forward(x_sbe, prepared, num_heads, ff_dim):
    """x_sbe: (S, B, E) — same layout as nn.MultiheadAttention (batch_first=False)."""
    S, B, E = x_sbe.shape
    assert E % num_heads == 0
    N = S * B
    x2d = x_sbe.reshape(N, E)                 # free: (S,B,E) is row-major contiguous

    kernel = functools.partial(johns_block_kernel, num_heads=num_heads, ff_dim=ff_dim)
    out2d = pl.pallas_call(
        kernel,
        out_shape=jax.ShapeDtypeStruct((N, E), x_sbe.dtype),
        # Single-tile problem: everything VMEM-resident, no grid / no pipelining
        # needed at these sizes (see header comment / v7x TODO).
        in_specs=[pl.BlockSpec(memory_space=pltpu.MemorySpace.VMEM)] * 3,
        out_specs=pl.BlockSpec(memory_space=pltpu.MemorySpace.VMEM),
    )(x2d, prepared["wpack"], prepared["vec"])
    return out2d.reshape(S, B, E)


# ----------------------------------------------------------------------------- reference
def johns_nn_reference(x_sbe, p, num_heads, mxu_dtype=jnp.float32, fold_scale=False):
    """Pure-JAX reference.  mxu_dtype=bfloat16 + fold_scale=True mirrors the
    kernel's MXU precision and scale-folding; defaults give module semantics."""
    x = jnp.transpose(x_sbe, (1, 0, 2)).astype(jnp.float32)    # (B, S, E)
    B, S, E = x.shape
    H = num_heads
    Dh = E // H
    scale = 1.0 / (Dh ** 0.5)

    wqkv, bqkv = p["wqkv"], p["bqkv"]
    if fold_scale:
        wqkv = wqkv.at[:, :E].multiply(scale)
        bqkv = bqkv.at[:, :E].multiply(scale)
        score_scale = 1.0
    else:
        score_scale = scale

    def mm(a, w):
        return jnp.einsum('...e,ef->...f', a.astype(mxu_dtype), w.astype(mxu_dtype),
                          preferred_element_type=jnp.float32)

    qkv = mm(x, wqkv) + bqkv[0]
    q, k, v = qkv[..., :E], qkv[..., E:2 * E], qkv[..., 2 * E:]
    qh = q.reshape(B, S, H, Dh).astype(mxu_dtype)
    kh = k.reshape(B, S, H, Dh).astype(mxu_dtype)
    vh = v.reshape(B, S, H, Dh).astype(mxu_dtype)
    s = jnp.einsum('bshd,bthd->bhst', qh, kh,
                   preferred_element_type=jnp.float32) * score_scale
    pw = jax.nn.softmax(s, axis=-1)
    ctx = jnp.einsum('bhst,bthd->bshd', pw.astype(mxu_dtype), vh,
                     preferred_element_type=jnp.float32).reshape(B, S, E)
    attn_out = mm(ctx, p["wo"]) + p["bo"][0]

    def ln(z, g, b):
        mu = jnp.mean(z, axis=-1, keepdims=True)
        var = jnp.mean((z - mu) ** 2, axis=-1, keepdims=True)
        return (z - mu) * jax.lax.rsqrt(var + 1e-5) * g + b

    y = ln(x + attn_out, p["g1"][0], p["be1"][0])
    h1 = jnp.maximum(mm(y, p["w1"]) + p["b1"][0], 0.0)
    ffn = mm(h1, p["w2"]) + p["b2"][0]
    out = ln(y + ffn, p["g2"][0], p["be2"][0])
    return jnp.transpose(out, (1, 0, 2))


# ----------------------------------------------------------------------------- main
if __name__ == "__main__":
    embed_dim, num_heads, ff_dim = 32, 4, 64
    seq_len, batch = 8, 2

    key = jax.random.PRNGKey(0)
    kx, kp = jax.random.split(key)
    x = jax.random.normal(kx, (seq_len, batch, embed_dim), jnp.float32)
    params = init_params(kp, embed_dim, num_heads, ff_dim)
    prepared = prepare_params(params, num_heads, seq_len, batch)

    out = johns_nn_forward(x, prepared, num_heads, ff_dim)
    out = jax.block_until_ready(out)
    assert out.shape == (seq_len, batch, embed_dim)

    # Structural check vs a reference mirroring the kernel's bf16-MXU + folded scale.
    ref_bf16 = johns_nn_reference(x, params, num_heads,
                                  mxu_dtype=jnp.bfloat16, fold_scale=True)
    assert jnp.allclose(out, ref_bf16, atol=5e-3, rtol=5e-3), \
        "mismatch vs bf16-MXU reference"

    # Module-semantics check vs the pure-f32 reference (bf16 rounding tolerance).
    ref_f32 = johns_nn_reference(x, params, num_heads, mxu_dtype=jnp.float32)
    assert jnp.allclose(out, ref_f32, atol=5e-2, rtol=5e-2), \
        "mismatch vs f32 module reference"

    print("KERNEL_OK")
</pallas_src>

<mosaic_0001>
module attributes {stable_mosaic.version = 11 : i64} {
  func.func @johns_block_kernel(%arg0: memref<16x32xf32, #tpu.memory_space<vmem>>, %arg1: memref<160x128xbf16, #tpu.memory_space<vmem>>, %arg2: memref<32x128xf32, #tpu.memory_space<vmem>>, %arg3: memref<16x32xf32, #tpu.memory_space<vmem>>) attributes {dimension_semantics = [], scalar_prefetch = 0 : i64, scratch_operands = 0 : i64, tpu.core_type = #tpu.core_type<tc>} {
    %c0 = arith.constant 0 : index
    %c0_0 = arith.constant 0 : index
    %0 = vector.load %arg0[%c0, %c0_0] : memref<16x32xf32, #tpu.memory_space<vmem>>, vector<16x32xf32>
    %c0_1 = arith.constant 0 : index
    %c0_2 = arith.constant 0 : index
    %1 = vector.load %arg1[%c0_1, %c0_2] : memref<160x128xbf16, #tpu.memory_space<vmem>>, vector<32x96xbf16>
    %c32 = arith.constant 32 : index
    %c0_3 = arith.constant 0 : index
    %2 = vector.load %arg1[%c32, %c0_3] : memref<160x128xbf16, #tpu.memory_space<vmem>>, vector<32x32xbf16>
    %c64 = arith.constant 64 : index
    %c0_4 = arith.constant 0 : index
    %3 = vector.load %arg1[%c64, %c0_4] : memref<160x128xbf16, #tpu.memory_space<vmem>>, vector<32x64xbf16>
    %c96 = arith.constant 96 : index
    %c0_5 = arith.constant 0 : index
    %4 = vector.load %arg1[%c96, %c0_5] : memref<160x128xbf16, #tpu.memory_space<vmem>>, vector<64x32xbf16>
    %c0_6 = arith.constant 0 : index
    %c0_7 = arith.constant 0 : index
    %5 = vector.load %arg2[%c0_6, %c0_7] : memref<32x128xf32, #tpu.memory_space<vmem>>, vector<32x128xf32>
    %6 = vector.extract_strided_slice %5 {offsets = [0, 0], sizes = [1, 96], strides = [1, 1]} : vector<32x128xf32> to vector<1x96xf32>
    %7 = vector.extract_strided_slice %5 {offsets = [1, 0], sizes = [1, 32], strides = [1, 1]} : vector<32x128xf32> to vector<1x32xf32>
    %8 = vector.extract_strided_slice %5 {offsets = [2, 0], sizes = [1, 32], strides = [1, 1]} : vector<32x128xf32> to vector<1x32xf32>
    %9 = vector.extract_strided_slice %5 {offsets = [3, 0], sizes = [1, 32], strides = [1, 1]} : vector<32x128xf32> to vector<1x32xf32>
    %10 = vector.extract_strided_slice %5 {offsets = [4, 0], sizes = [1, 64], strides = [1, 1]} : vector<32x128xf32> to vector<1x64xf32>
    %11 = vector.extract_strided_slice %5 {offsets = [5, 0], sizes = [1, 32], strides = [1, 1]} : vector<32x128xf32> to vector<1x32xf32>
    %12 = vector.extract_strided_slice %5 {offsets = [6, 0], sizes = [1, 32], strides = [1, 1]} : vector<32x128xf32> to vector<1x32xf32>
    %13 = vector.extract_strided_slice %5 {offsets = [7, 0], sizes = [1, 32], strides = [1, 1]} : vector<32x128xf32> to vector<1x32xf32>
    %14 = vector.extract_strided_slice %5 {offsets = [8, 0], sizes = [16, 1], strides = [1, 1]} : vector<32x128xf32> to vector<16x1xf32>
    %15 = vector.extract_strided_slice %5 {offsets = [24, 0], sizes = [1, 16], strides = [1, 1]} : vector<32x128xf32> to vector<1x16xf32>
    %16 = arith.truncf %0 : vector<16x32xf32> to vector<16x32xbf16>
    %cst = arith.constant dense<0.000000e+00> : vector<16x96xf32>
    %17 = tpu.matmul %16, %1, %cst {dimension_numbers = #tpu.dot_dimension_numbers<[1], [0], [0], [1], [0, 0, 1, 1], [], []>} : vector<16x32xbf16>, vector<32x96xbf16>, vector<16x96xf32> -> vector<16x96xf32>
    %18 = vector.broadcast %6 : vector<1x96xf32> to vector<16x96xf32>
    %19 = arith.addf %17, %18 : vector<16x96xf32>
    %20 = vector.extract_strided_slice %19 {offsets = [0, 0], sizes = [16, 32], strides = [1, 1]} : vector<16x96xf32> to vector<16x32xf32>
    %21 = vector.extract_strided_slice %19 {offsets = [0, 32], sizes = [16, 32], strides = [1, 1]} : vector<16x96xf32> to vector<16x32xf32>
    %22 = vector.extract_strided_slice %19 {offsets = [0, 64], sizes = [16, 32], strides = [1, 1]} : vector<16x96xf32> to vector<16x32xf32>
    %23 = tpu.transpose %21, [1, 0] : vector<16x32xf32> -> vector<32x16xf32>
    %24 = arith.truncf %23 : vector<32x16xf32> to vector<32x16xbf16>
    %25 = tpu.iota {dimensions = array<i32: 1>} : vector<16x32xi32>
    %c0_i32 = arith.constant 0 : i32
    %26 = vector.broadcast %c0_i32 : i32 to vector<16x32xi32>
    %27 = arith.cmpi sge, %25, %26 : vector<16x32xi32>
    %c8_i32 = arith.constant 8 : i32
    %28 = vector.broadcast %c8_i32 : i32 to vector<16x32xi32>
    %29 = arith.cmpi slt, %25, %28 : vector<16x32xi32>
    %30 = arith.andi %27, %29 : vector<16x32xi1>
    %cst_8 = arith.constant 1.000000e+00 : f32
    %cst_9 = arith.constant 0.000000e+00 : f32
    %31 = vector.broadcast %cst_8 : f32 to vector<16x32xf32>
    %32 = vector.broadcast %cst_9 : f32 to vector<16x32xf32>
    %33 = arith.select %30, %31, %32 : vector<16x32xi1>, vector<16x32xf32>
    %c8_i32_10 = arith.constant 8 : i32
    %34 = vector.broadcast %c8_i32_10 : i32 to vector<16x32xi32>
    %35 = arith.cmpi sge, %25, %34 : vector<16x32xi32>
    %c16_i32 = arith.constant 16 : i32
    %36 = vector.broadcast %c16_i32 : i32 to vector<16x32xi32>
    %37 = arith.cmpi slt, %25, %36 : vector<16x32xi32>
    %38 = arith.andi %35, %37 : vector<16x32xi1>
    %cst_11 = arith.constant 1.000000e+00 : f32
    %cst_12 = arith.constant 0.000000e+00 : f32
    %39 = vector.broadcast %cst_11 : f32 to vector<16x32xf32>
    %40 = vector.broadcast %cst_12 : f32 to vector<16x32xf32>
    %41 = arith.select %38, %39, %40 : vector<16x32xi1>, vector<16x32xf32>
    %c16_i32_13 = arith.constant 16 : i32
    %42 = vector.broadcast %c16_i32_13 : i32 to vector<16x32xi32>
    %43 = arith.cmpi sge, %25, %42 : vector<16x32xi32>
    %c24_i32 = arith.constant 24 : i32
    %44 = vector.broadcast %c24_i32 : i32 to vector<16x32xi32>
    %45 = arith.cmpi slt, %25, %44 : vector<16x32xi32>
    %46 = arith.andi %43, %45 : vector<16x32xi1>
    %cst_14 = arith.constant 1.000000e+00 : f32
    %cst_15 = arith.constant 0.000000e+00 : f32
    %47 = vector.broadcast %cst_14 : f32 to vector<16x32xf32>
    %48 = vector.broadcast %cst_15 : f32 to vector<16x32xf32>
    %49 = arith.select %46, %47, %48 : vector<16x32xi1>, vector<16x32xf32>
    %c24_i32_16 = arith.constant 24 : i32
    %50 = vector.broadcast %c24_i32_16 : i32 to vector<16x32xi32>
    %51 = arith.cmpi sge, %25, %50 : vector<16x32xi32>
    %c32_i32 = arith.constant 32 : i32
    %52 = vector.broadcast %c32_i32 : i32 to vector<16x32xi32>
    %53 = arith.cmpi slt, %25, %52 : vector<16x32xi32>
    %54 = arith.andi %51, %53 : vector<16x32xi1>
    %cst_17 = arith.constant 1.000000e+00 : f32
    %cst_18 = arith.constant 0.000000e+00 : f32
    %55 = vector.broadcast %cst_17 : f32 to vector<16x32xf32>
    %56 = vector.broadcast %cst_18 : f32 to vector<16x32xf32>
    %57 = arith.select %54, %55, %56 : vector<16x32xi1>, vector<16x32xf32>
    %58 = tpu.concatenate %33, %41, %49, %57 in 0 : vector<16x32xf32>, vector<16x32xf32>, vector<16x32xf32>, vector<16x32xf32> -> vector<64x32xf32>
    %59 = tpu.concatenate %20, %20, %20, %20 in 0 : vector<16x32xf32>, vector<16x32xf32>, vector<16x32xf32>, vector<16x32xf32> -> vector<64x32xf32>
    %60 = arith.mulf %59, %58 : vector<64x32xf32>
    %61 = arith.truncf %60 : vector<64x32xf32> to vector<64x32xbf16>
    %cst_19 = arith.constant dense<0.000000e+00> : vector<64x16xf32>
    %62 = tpu.matmul %61, %24, %cst_19 {dimension_numbers = #tpu.dot_dimension_numbers<[1], [0], [0], [1], [0, 0, 1, 1], [], []>} : vector<64x32xbf16>, vector<32x16xbf16>, vector<64x16xf32> -> vector<64x16xf32>
    %63 = tpu.concatenate %14, %14, %14, %14 in 0 : vector<16x1xf32>, vector<16x1xf32>, vector<16x1xf32>, vector<16x1xf32> -> vector<64x1xf32>
    %64 = vector.broadcast %63 : vector<64x1xf32> to vector<64x16xf32>
    %65 = vector.broadcast %15 : vector<1x16xf32> to vector<64x16xf32>
    %66 = arith.cmpf oeq, %64, %65 : vector<64x16xf32>
    %cst_20 = arith.constant -1.000000e+30 : f32
    %67 = vector.broadcast %cst_20 : f32 to vector<64x16xf32>
    %68 = arith.select %66, %62, %67 : vector<64x16xi1>, vector<64x16xf32>
    %cst_21 = arith.constant dense<0xFF800000> : vector<64xf32>
    %69 = vector.multi_reduction <maximumf>, %68, %cst_21 [1] : vector<64x16xf32> to vector<64xf32>
    %70 = vector.shape_cast %69 : vector<64xf32> to vector<64x1xf32>
    %71 = vector.broadcast %70 : vector<64x1xf32> to vector<64x16xf32>
    %72 = arith.subf %68, %71 : vector<64x16xf32>
    %73 = math.exp %72 : vector<64x16xf32>
    %cst_22 = arith.constant dense<0.000000e+00> : vector<64xf32>
    %74 = vector.multi_reduction <add>, %73, %cst_22 [1] : vector<64x16xf32> to vector<64xf32>
    %75 = vector.shape_cast %74 : vector<64xf32> to vector<64x1xf32>
    %76 = tpu.reciprocal %75 {approx = true} : vector<64x1xf32> -> vector<64x1xf32>
    %77 = vector.broadcast %76 : vector<64x1xf32> to vector<64x16xf32>
    %78 = arith.mulf %73, %77 : vector<64x16xf32>
    %79 = arith.truncf %78 : vector<64x16xf32> to vector<64x16xbf16>
    %80 = arith.truncf %22 : vector<16x32xf32> to vector<16x32xbf16>
    %cst_23 = arith.constant dense<0.000000e+00> : vector<64x32xf32>
    %81 = tpu.matmul %79, %80, %cst_23 {dimension_numbers = #tpu.dot_dimension_numbers<[1], [0], [0], [1], [0, 0, 1, 1], [], []>} : vector<64x16xbf16>, vector<16x32xbf16>, vector<64x32xf32> -> vector<64x32xf32>
    %82 = arith.mulf %81, %58 : vector<64x32xf32>
    %83 = vector.extract_strided_slice %82 {offsets = [0, 0], sizes = [16, 32], strides = [1, 1]} : vector<64x32xf32> to vector<16x32xf32>
    %84 = vector.extract_strided_slice %82 {offsets = [16, 0], sizes = [16, 32], strides = [1, 1]} : vector<64x32xf32> to vector<16x32xf32>
    %85 = arith.addf %83, %84 : vector<16x32xf32>
    %86 = vector.extract_strided_slice %82 {offsets = [32, 0], sizes = [16, 32], strides = [1, 1]} : vector<64x32xf32> to vector<16x32xf32>
    %87 = arith.addf %85, %86 : vector<16x32xf32>
    %88 = vector.extract_strided_slice %82 {offsets = [48, 0], sizes = [16, 32], strides = [1, 1]} : vector<64x32xf32> to vector<16x32xf32>
    %89 = arith.addf %87, %88 : vector<16x32xf32>
    %90 = arith.truncf %89 : vector<16x32xf32> to vector<16x32xbf16>
    %cst_24 = arith.constant dense<0.000000e+00> : vector<16x32xf32>
    %91 = tpu.matmul %90, %2, %cst_24 {dimension_numbers = #tpu.dot_dimension_numbers<[1], [0], [0], [1], [0, 0, 1, 1], [], []>} : vector<16x32xbf16>, vector<32x32xbf16>, vector<16x32xf32> -> vector<16x32xf32>
    %92 = vector.broadcast %7 : vector<1x32xf32> to vector<16x32xf32>
    %93 = arith.addf %91, %92 : vector<16x32xf32>
    %94 = arith.addf %0, %93 : vector<16x32xf32>
    %cst_25 = arith.constant dense<0.000000e+00> : vector<16xf32>
    %95 = vector.multi_reduction <add>, %94, %cst_25 [1] : vector<16x32xf32> to vector<16xf32>
    %96 = vector.shape_cast %95 : vector<16xf32> to vector<16x1xf32>
    %cst_26 = arith.constant 3.200000e+01 : f32
    %97 = vector.broadcast %cst_26 : f32 to vector<16x1xf32>
    %98 = arith.divf %96, %97 : vector<16x1xf32>
    %99 = vector.broadcast %98 : vector<16x1xf32> to vector<16x32xf32>
    %100 = arith.subf %94, %99 : vector<16x32xf32>
    %101 = arith.mulf %100, %100 : vector<16x32xf32>
    %cst_27 = arith.constant dense<0.000000e+00> : vector<16xf32>
    %102 = vector.multi_reduction <add>, %101, %cst_27 [1] : vector<16x32xf32> to vector<16xf32>
    %103 = vector.shape_cast %102 : vector<16xf32> to vector<16x1xf32>
    %cst_28 = arith.constant 3.200000e+01 : f32
    %104 = vector.broadcast %cst_28 : f32 to vector<16x1xf32>
    %105 = arith.divf %103, %104 : vector<16x1xf32>
    %106 = vector.broadcast %98 : vector<16x1xf32> to vector<16x32xf32>
    %107 = arith.subf %94, %106 : vector<16x32xf32>
    %cst_29 = arith.constant 9.99999974E-6 : f32
    %108 = vector.broadcast %cst_29 : f32 to vector<16x1xf32>
    %109 = arith.addf %105, %108 : vector<16x1xf32>
    %110 = math.rsqrt %109 : vector<16x1xf32>
    %111 = vector.broadcast %110 : vector<16x1xf32> to vector<16x32xf32>
    %112 = arith.mulf %107, %111 : vector<16x32xf32>
    %113 = vector.broadcast %8 : vector<1x32xf32> to vector<16x32xf32>
    %114 = arith.mulf %112, %113 : vector<16x32xf32>
    %115 = vector.broadcast %9 : vector<1x32xf32> to vector<16x32xf32>
    %116 = arith.addf %114, %115 : vector<16x32xf32>
    %117 = arith.truncf %116 : vector<16x32xf32> to vector<16x32xbf16>
    %cst_30 = arith.constant dense<0.000000e+00> : vector<16x64xf32>
    %118 = tpu.matmul %117, %3, %cst_30 {dimension_numbers = #tpu.dot_dimension_numbers<[1], [0], [0], [1], [0, 0, 1, 1], [], []>} : vector<16x32xbf16>, vector<32x64xbf16>, vector<16x64xf32> -> vector<16x64xf32>
    %119 = vector.broadcast %10 : vector<1x64xf32> to vector<16x64xf32>
    %120 = arith.addf %118, %119 : vector<16x64xf32>
    %cst_31 = arith.constant 0.000000e+00 : f32
    %121 = vector.broadcast %cst_31 : f32 to vector<16x64xf32>
    %122 = arith.maximumf %120, %121 : vector<16x64xf32>
    %123 = arith.truncf %122 : vector<16x64xf32> to vector<16x64xbf16>
    %cst_32 = arith.constant dense<0.000000e+00> : vector<16x32xf32>
    %124 = tpu.matmul %123, %4, %cst_32 {dimension_numbers = #tpu.dot_dimension_numbers<[1], [0], [0], [1], [0, 0, 1, 1], [], []>} : vector<16x64xbf16>, vector<64x32xbf16>, vector<16x32xf32> -> vector<16x32xf32>
    %125 = vector.broadcast %11 : vector<1x32xf32> to vector<16x32xf32>
    %126 = arith.addf %124, %125 : vector<16x32xf32>
    %127 = arith.addf %116, %126 : vector<16x32xf32>
    %cst_33 = arith.constant dense<0.000000e+00> : vector<16xf32>
    %128 = vector.multi_reduction <add>, %127, %cst_33 [1] : vector<16x32xf32> to vector<16xf32>
    %129 = vector.shape_cast %128 : vector<16xf32> to vector<16x1xf32>
    %cst_34 = arith.constant 3.200000e+01 : f32
    %130 = vector.broadcast %cst_34 : f32 to vector<16x1xf32>
    %131 = arith.divf %129, %130 : vector<16x1xf32>
    %132 = vector.broadcast %131 : vector<16x1xf32> to vector<16x32xf32>
    %133 = arith.subf %127, %132 : vector<16x32xf32>
    %134 = arith.mulf %133, %133 : vector<16x32xf32>
    %cst_35 = arith.constant dense<0.000000e+00> : vector<16xf32>
    %135 = vector.multi_reduction <add>, %134, %cst_35 [1] : vector<16x32xf32> to vector<16xf32>
    %136 = vector.shape_cast %135 : vector<16xf32> to vector<16x1xf32>
    %cst_36 = arith.constant 3.200000e+01 : f32
    %137 = vector.broadcast %cst_36 : f32 to vector<16x1xf32>
    %138 = arith.divf %136, %137 : vector<16x1xf32>
    %139 = vector.broadcast %131 : vector<16x1xf32> to vector<16x32xf32>
    %140 = arith.subf %127, %139 : vector<16x32xf32>
    %cst_37 = arith.constant 9.99999974E-6 : f32
    %141 = vector.broadcast %cst_37 : f32 to vector<16x1xf32>
    %142 = arith.addf %138, %141 : vector<16x1xf32>
    %143 = math.rsqrt %142 : vector<16x1xf32>
    %144 = vector.broadcast %143 : vector<16x1xf32> to vector<16x32xf32>
    %145 = arith.mulf %140, %144 : vector<16x32xf32>
    %146 = vector.broadcast %12 : vector<1x32xf32> to vector<16x32xf32>
    %147 = arith.mulf %145, %146 : vector<16x32xf32>
    %148 = vector.broadcast %13 : vector<1x32xf32> to vector<16x32xf32>
    %149 = arith.addf %147, %148 : vector<16x32xf32>
    %c0_38 = arith.constant 0 : index
    %c0_39 = arith.constant 0 : index
    %150 = vector.load %arg3[%c0_38, %c0_39] : memref<16x32xf32, #tpu.memory_space<vmem>>, vector<16x32xf32>
    tpu.vector_store %arg3[%c0_38, %c0_39], %149 {strides = array<i32>} : memref<16x32xf32, #tpu.memory_space<vmem>>, vector<16x32xf32>,
    return
  }
}

</mosaic_0001>

<llo_original>
// kernel: johns_nn_forward.1
$region0: #{johns_nn_forward.1}
  #allocation0 [shape = 'u32[]', space=smem, size = 0x4, offset = 0x4, fixed_abs, tag = 'smem constant byte address 0x4 - core index']
  #allocation1 [shape = 'u32[144,128]{1,0:T(1,128)}', space=vmem, size = 0x12000, scoped, tag = 'internal scratch']
  %s0 = inlined_call_operand.hbm [shape: f32[16,32], index: 0, kind: input, shape index: {}]
  %s1 = inlined_call_operand.hbm [shape: bf16[160,128], index: 1, kind: input, shape index: {}]
  %s2 = inlined_call_operand.hbm [shape: f32[32,128], index: 2, kind: input, shape index: {}]
  %s3 = inlined_call_operand.hbm [shape: f32[16,32], index: 3, kind: output, shape index: {}]
  %s4 = sld [smem:[#allocation0]]
  $region34: #{johns_nn_forward.1} parent=0
    _
  %s6 = ssub.s32 1, %s4
  %s7 = scalar_select 0, %s6, %s4
  $region1: #{johns_nn_forward.1} parent=0
    #allocation2 [shape = 'u8[8192]{0}', space=vmem, size = 0x2000, scoped, tag = 'input window, operand 0, single buffered']
    #allocation3 [shape = 's32[1]{0}', space=sflag, size = 0x4, scoped, tag = 'scoped memory for johns_nn_forward.1']
    #allocation4 [shape = 's32[1]{0}', space=sflag, size = 0x4, scoped, tag = 'scoped memory for johns_nn_forward.1']
    #allocation5 [shape = 'u8[40960]{0}', space=vmem, size = 0xa000, scoped, tag = 'input window, operand 1, single buffered']
    #allocation6 [shape = 's32[1]{0}', space=sflag, size = 0x4, scoped, tag = 'scoped memory for johns_nn_forward.1']
    #allocation7 [shape = 'u8[16384]{0}', space=vmem, size = 0x4000, scoped, tag = 'input window, operand 2, single buffered']
    #allocation8 [shape = 'u8[8192]{0}', space=vmem, size = 0x2000, scoped, tag = 'output window, operand 0, single buffered']
    %8 = vsyncpa [#allocation3], 0
    %9 = vsyncpa [#allocation6], 0
    %10 = vsyncpa [#allocation4], 0
    // Predicated region
    $region2: #{johns_nn_forward.1} parent=1 // pred_check
      _
    $region3: #{johns_nn_forward.1} parent=1 // pred_check_branch
      %12 = sbr.rel (0) target = $region5
    $region4: #{johns_nn_forward.1} parent=1 // pred_region
      %s14 = ssub.s32 256, 256
      %15 = vsyncadd [#allocation3], %s14
      %s16 = sshll.u32 [#allocation2], 4
      %s17 = int_to_ptr.vmem [resolvable:$true] %s16
      %22 = dma.hbm_to_vmem [thread:$0]  %s0, 256, %s17, [#allocation3], 128, 128, 8
    $region5: #{johns_nn_forward.1} parent=1 // pred_fallthru
      _
    // Predicated region
    $region6: #{johns_nn_forward.1} parent=1 // pred_check
      _
    $region7: #{johns_nn_forward.1} parent=1 // pred_check_branch
      %24 = sbr.rel (0) target = $region9
    $region8: #{johns_nn_forward.1} parent=1 // pred_region
      %s26 = ssub.s32 1280, 1280
      %27 = vsyncadd [#allocation6], %s26
      %s28 = sshll.u32 [#allocation5], 4
      %s29 = int_to_ptr.vmem [resolvable:$true] %s28
      %34 = dma.hbm_to_vmem [thread:$0]  %s1, 1280, %s29, [#allocation6], 64, 64, 4
    $region9: #{johns_nn_forward.1} parent=1 // pred_fallthru
      _
    // Predicated region
    $region10: #{johns_nn_forward.1} parent=1 // pred_check
      _
    $region11: #{johns_nn_forward.1} parent=1 // pred_check_branch
      %36 = sbr.rel (0) target = $region13
    $region12: #{johns_nn_forward.1} parent=1 // pred_region
      %s38 = ssub.s32 512, 512
      %39 = vsyncadd [#allocation6], %s38
      %s40 = sshll.u32 [#allocation7], 4
      %s41 = int_to_ptr.vmem [resolvable:$true] %s40
      %46 = dma.hbm_to_vmem [thread:$0]  %s2, 512, %s41, [#allocation6], 128, 128, 8
    $region13: #{johns_nn_forward.1} parent=1 // pred_fallthru
      _
    // Predicated region
    $region14: #{johns_nn_forward.1} parent=1 // pred_check
      _
    $region15: #{johns_nn_forward.1} parent=1 // pred_check_branch
      %48 = sbr.rel (0) target = $region17
    $region16: #{johns_nn_forward.1} parent=1 // pred_region
      %49 = dma.done [#allocation3], 256
    $region17: #{johns_nn_forward.1} parent=1 // pred_fallthru
      _
    // Predicated region
    $region18: #{johns_nn_forward.1} parent=1 // pred_check
      _
    $region19: #{johns_nn_forward.1} parent=1 // pred_check_branch
      %51 = sbr.rel (0) target = $region21
    $region20: #{johns_nn_forward.1} parent=1 // pred_region
      %52 = dma.done [#allocation6], 1280
    $region21: #{johns_nn_forward.1} parent=1 // pred_fallthru
      _
    // Predicated region
    $region22: #{johns_nn_forward.1} parent=1 // pred_check
      _
    $region23: #{johns_nn_forward.1} parent=1 // pred_check_branch
      %54 = sbr.rel (0) target = $region25
    $region24: #{johns_nn_forward.1} parent=1 // pred_region
      %55 = dma.done [#allocation6], 512
    $region25: #{johns_nn_forward.1} parent=1 // pred_fallthru
      _
    %v57 = vld [vmem:[#allocation2] sm:$0xff]
    %v58 = vld [vmem:[#allocation2 + $0x8] sm:$0xff]
    %v59 = vld [vmem:[#allocation5] sm:$0xf]
    %v60 = vld [vmem:[#allocation5 + $0x4] sm:$0xf]
    %v61 = vld [vmem:[#allocation5 + $0x8] sm:$0xf]
    %v62 = vld [vmem:[#allocation5 + $0xc] sm:$0xf]
    %v63 = vld [vmem:[#allocation5 + $0x10] sm:$0xf]
    %v64 = vld [vmem:[#allocation5 + $0x14] sm:$0xf]
    %v65 = vld [vmem:[#allocation5 + $0x18] sm:$0xf]
    %v66 = vld [vmem:[#allocation5 + $0x1c] sm:$0xf]
    %v67 = vld [vmem:[#allocation5 + $0x20] sm:$0xf]
    %v68 = vld [vmem:[#allocation5 + $0x24] sm:$0xf]
    %v69 = vld [vmem:[#allocation5 + $0x28] sm:$0xf]
    %v70 = vld [vmem:[#allocation5 + $0x2c] sm:$0xf]
    %v71 = vld [vmem:[#allocation5 + $0x30] sm:$0xf]
    %v72 = vld [vmem:[#allocation5 + $0x34] sm:$0xf]
    %v73 = vld [vmem:[#allocation5 + $0x38] sm:$0xf]
    %v74 = vld [vmem:[#allocation5 + $0x3c] sm:$0xf]
    %v75 = vld [vmem:[#allocation5 + $0x40] sm:$0xf]
    %v76 = vld [vmem:[#allocation5 + $0x44] sm:$0xf]
    %v77 = vld [vmem:[#allocation5 + $0x48] sm:$0xf]
    %v78 = vld [vmem:[#allocation5 + $0x4c] sm:$0xf]
    %v79 = vld [vmem:[#allocation7] sm:$0xff]
    %v80 = vld [vmem:[#allocation7 + $0x8] sm:$0xff]
    %v81 = vld [vmem:[#allocation7 + $0x10] sm:$0xff]
    %v82 = vld [vmem:[#allocation7 + $0x18] sm:$0xff]
    %v83 = vpack.c.bf16 %v58, %v57
    %v84 = vlaneseq
    %v85 = vshrl.u32 %v84, 7
    %v86 = vsub.s32 0, %v85
    %v87 = vrot.slane %v79, %v86
    %v92 = vunpack.c.l.b16 %v59
    %v93 = vunpack.c.l.b16 %v60
    %v94 = vunpack.c.l.b16 %v61
    %v95 = vunpack.c.l.b16 %v62
    %v96 = vpack.c.b16 %v93, %v92
    %v97 = vpack.c.b16 %v95, %v94
    %vm100 = vcmask 261120
    %v102 = vsel %vm100, %v83, 0
    %104 = vmatprep.subr.bf16.mxu0 0
    %105 = vmatpush1.bf16.msra.mxu0 %v96
    %106 = vmatprep.subr.bf16.mxu0 0
    %107 = vmatpush1.bf16.msra.mxu0 %v97
    %108 = vmatprep.subr.bf16.mxu0 0
    %109 = vmatpush1.bf16.msra.mxu0 0
    %110 = vmatprep.subr.bf16.mxu0 0
    %111 = vmatpush1.bf16.msra.mxu0 0
    %112 = vmatprep.subr.bf16.mxu0 0
    %113 = vmatpush1.bf16.msra.mxu0 0
    %114 = vmatprep.subr.bf16.mxu0 0
    %115 = vmatpush1.bf16.msra.mxu0 0
    %116 = vmatprep.subr.bf16.mxu0 0
    %117 = vmatpush1.bf16.msra.mxu0 0
    %118 = vmatprep.subr.bf16.mxu0 0
    %119 = vmatpush1.bf16.msra.mxu0 0
    %120 = vmatprep.subr.bf16.mxu0 0
    %121 = vmatpush1.bf16.msra.mxu0 0
    %122 = vmatprep.subr.bf16.mxu0 0
    %123 = vmatpush1.bf16.msra.mxu0 0
    %124 = vmatprep.subr.bf16.mxu0 0
    %125 = vmatpush1.bf16.msra.mxu0 0
    %126 = vmatprep.subr.bf16.mxu0 0
    %127 = vmatpush1.bf16.msra.mxu0 0
    %128 = vmatprep.subr.bf16.mxu0 0
    %129 = vmatpush1.bf16.msra.mxu0 0
    %130 = vmatprep.subr.bf16.mxu0 0
    %131 = vmatpush1.bf16.msra.mxu0 0
    %132 = vmatprep.subr.bf16.mxu0 0
    %133 = vmatpush1.bf16.msra.mxu0 0
    %134 = vmatprep.subr.bf16.mxu0 0
    %135 = vmatpush1.bf16.msra.mxu0 0
    %136 = vmatprep.mubr.bf16.mxu0 0
    %137 = vmatmul.mubr.bf16.gmra.mrb[0].mxu0 %v102
    %v138 = vpop.f32.mrb[0].mxu0
    %v139 = vadd.f32 %v87, %v138
    %v140 = vpop.f32.mrb[0].mxu0
    %v141 = vpop.f32.mrb[0].mxu0
    %v142 = vadd.f32 %v87, %v141
    %v143 = vpop.f32.mrb[0].mxu0
    %144 = vdwg.mxu0
    %147 = vrot.lane.b32.xlu0 %v139, 96
    %v148 = vpop.permute.xlu0 %147
    %149 = vrot.lane.b32.xlu0 %v142, 96
    %v150 = vpop.permute.xlu0 %149
    %153 = vxpose.xlu0.b32.start [1/16] %v148, 128
    %154 = vxpose.xlu0.b32.cont [2/16] %v150, 128
    %155 = vxpose.xlu0.b32.cont [3/16] 0.0, 128
    %156 = vxpose.xlu0.b32.cont [4/16] 0.0, 128
    %157 = vxpose.xlu0.b32.cont [5/16] 0.0, 128
    %158 = vxpose.xlu0.b32.cont [6/16] 0.0, 128
    %159 = vxpose.xlu0.b32.cont [7/16] 0.0, 128
    %160 = vxpose.xlu0.b32.cont [8/16] 0.0, 128
    %161 = vxpose.xlu0.b32.cont [9/16] 0.0, 128
    %162 = vxpose.xlu0.b32.cont [10/16] 0.0, 128
    %163 = vxpose.xlu0.b32.cont [11/16] 0.0, 128
    %164 = vxpose.xlu0.b32.cont [12/16] 0.0, 128
    %165 = vxpose.xlu0.b32.cont [13/16] 0.0, 128
    %166 = vxpose.xlu0.b32.cont [14/16] 0.0, 128
    %167 = vxpose.xlu0.b32.cont [15/16] 0.0, 128
    %168 = vxpose.xlu0.b32.end [16/16] 0.0, 128
    %v169 = vpop.trf.xlu0
    %v170 = vpop.trf.xlu0
    %v171 = vpop.trf.xlu0
    %v172 = vpop.trf.xlu0
    %v173 = vpop.trf.xlu0
    %v174 = vpop.trf.xlu0
    %v175 = vpop.trf.xlu0
    %v176 = vpop.trf.xlu0
    %v177 = vpop.trf.xlu0
    %v178 = vpop.trf.xlu0
    %v179 = vpop.trf.xlu0
    %v180 = vpop.trf.xlu0
    %v181 = vpop.trf.xlu0
    %v182 = vpop.trf.xlu0
    %v183 = vpop.trf.xlu0
    %v184 = vpop.trf.xlu0
    %v185 = vpack.c.bf16 %v170, %v169
    %v186 = vpack.c.bf16 %v172, %v171
    %v187 = vlaneseq
    %v188 = vand.u32 %v187, 127
    %vm189 = vcmp.ge.s32.totalorder %v188, 0
    %vm190 = vcmp.lt.s32.totalorder %v188, 8
    %vm191 = vmand %vm189, %vm190
    %v192 = vsel %vm191, 1.0, 0.0
    %vm193 = vcmp.ge.s32.totalorder %v188, 8
    %vm194 = vcmp.lt.s32.totalorder %v188, 16
    %vm195 = vmand %vm193, %vm194
    %v196 = vsel %vm195, 1.0, 0.0
    %vm197 = vcmp.ge.s32.totalorder %v188, 16
    %vm198 = vcmp.lt.s32.totalorder %v188, 24
    %vm199 = vmand %vm197, %vm198
    %v200 = vsel %vm199, 1.0, 0.0
    %vm201 = vcmp.ge.s32.totalorder %v188, 24
    %vm202 = vcmp.lt.s32.totalorder %v188, 32
    %vm203 = vmand %vm201, %vm202
    %v204 = vsel %vm203, 1.0, 0.0
    %v205 = vmul.f32 %v139, %v192
    %v206 = vmul.f32 %v142, %v192
    %v207 = vmul.f32 %v139, %v196
    %v208 = vmul.f32 %v142, %v196
    %v209 = vmul.f32 %v139, %v200
    %v210 = vmul.f32 %v142, %v200
    %v211 = vmul.f32 %v139, %v204
    %v212 = vmul.f32 %v142, %v204
    %v213 = vpack.c.bf16 %v206, %v205
    %v214 = vpack.c.bf16 %v208, %v207
    %v215 = vpack.c.bf16 %v210, %v209
    %v216 = vpack.c.bf16 %v212, %v211
    %v218 = vsel %vm100, %v213, 0
    %v221 = vsel %vm100, %v214, 0
    %v224 = vsel %vm100, %v215, 0
    %v227 = vsel %vm100, %v216, 0
    %229 = vmatprep.subr.bf16.mxu0 0
    %230 = vmatpush1.bf16.msra.mxu0 %v185
    %231 = vmatprep.subr.bf16.mxu0 0
    %232 = vmatpush1.bf16.msra.mxu0 %v186
    %233 = vmatprep.subr.bf16.mxu0 0
    %234 = vmatpush1.bf16.msra.mxu0 0
    %235 = vmatprep.subr.bf16.mxu0 0
    %236 = vmatpush1.bf16.msra.mxu0 0
    %237 = vmatprep.subr.bf16.mxu0 0
    %238 = vmatpush1.bf16.msra.mxu0 0
    %239 = vmatprep.subr.bf16.mxu0 0
    %240 = vmatpush1.bf16.msra.mxu0 0
    %241 = vmatprep.subr.bf16.mxu0 0
    %242 = vmatpush1.bf16.msra.mxu0 0
    %243 = vmatprep.subr.bf16.mxu0 0
    %244 = vmatpush1.bf16.msra.mxu0 0
    %245 = vmatprep.subr.bf16.mxu0 0
    %246 = vmatpush1.bf16.msra.mxu0 0
    %247 = vmatprep.subr.bf16.mxu0 0
    %248 = vmatpush1.bf16.msra.mxu0 0
    %249 = vmatprep.subr.bf16.mxu0 0
    %250 = vmatpush1.bf16.msra.mxu0 0
    %251 = vmatprep.subr.bf16.mxu0 0
    %252 = vmatpush1.bf16.msra.mxu0 0
    %253 = vmatprep.subr.bf16.mxu0 0
    %254 = vmatpush1.bf16.msra.mxu0 0
    %255 = vmatprep.subr.bf16.mxu0 0
    %256 = vmatpush1.bf16.msra.mxu0 0
    %257 = vmatprep.subr.bf16.mxu0 0
    %258 = vmatpush1.bf16.msra.mxu0 0
    %259 = vmatprep.subr.bf16.mxu0 0
    %260 = vmatpush1.bf16.msra.mxu0 0
    %261 = vmatprep.mubr.bf16.mxu0 0
    %262 = vmatmul.mubr.bf16.gmra.mrb[0].mxu0 %v218
    %v263 = vpop.f32.mrb[0].mxu0
    %v264 = vadd.f32 0.0, %v263
    %v265 = vpop.f32.mrb[0].mxu0
    %v266 = vpop.f32.mrb[0].mxu0
    %v267 = vadd.f32 0.0, %v266
    %v268 = vpop.f32.mrb[0].mxu0
    %269 = vmatprep.mubr.bf16.mxu0 0
    %270 = vmatmul.mubr.bf16.gmra.mrb[0].mxu0 %v221
    %v271 = vpop.f32.mrb[0].mxu0
    %v272 = vadd.f32 0.0, %v271
    %v273 = vpop.f32.mrb[0].mxu0
    %v274 = vpop.f32.mrb[0].mxu0
    %v275 = vadd.f32 0.0, %v274
    %v276 = vpop.f32.mrb[0].mxu0
    %277 = vmatprep.mubr.bf16.mxu0 0
    %278 = vmatmul.mubr.bf16.gmra.mrb[0].mxu0 %v224
    %v279 = vpop.f32.mrb[0].mxu0
    %v280 = vadd.f32 0.0, %v279
    %v281 = vpop.f32.mrb[0].mxu0
    %v282 = vpop.f32.mrb[0].mxu0
    %v283 = vadd.f32 0.0, %v282
    %v284 = vpop.f32.mrb[0].mxu0
    %285 = vmatprep.mubr.bf16.mxu0 0
    %286 = vmatmul.mubr.bf16.gmra.mrb[0].mxu0 %v227
    %v287 = vpop.f32.mrb[0].mxu0
    %v288 = vadd.f32 0.0, %v287
    %v289 = vpop.f32.mrb[0].mxu0
    %v290 = vpop.f32.mrb[0].mxu0
    %v291 = vadd.f32 0.0, %v290
    %v292 = vpop.f32.mrb[0].mxu0
    %293 = vdwg.mxu0
    %295 = vset.pattern.permute.xlu0 0
    %296 = vperm.xlu0 %295, %v80
    %v297 = vpop.permute.xlu0 %296
    %300 = vset.pattern.permute.xlu0 0
    %301 = vperm.xlu0 %300, %v81
    %v302 = vpop.permute.xlu0 %301
    %v304 = vlaneseq
    %v305 = vshrl.u32 %v304, 7
    %v306 = vsub.s32 0, %v305
    %v307 = vrot.slane %v82, %v306
    %vm308 = vcmp.eq.f32.partialorder %v297, %v307
    %vm309 = vcmp.eq.f32.partialorder %v302, %v307
    %v310 = vsel %vm308, %v264, -1e+30
    %v311 = vsel %vm309, %v267, -1e+30
    %v312 = vsel %vm308, %v272, -1e+30
    %v313 = vsel %vm309, %v275, -1e+30
    %v314 = vsel %vm308, %v280, -1e+30
    %v315 = vsel %vm309, %v283, -1e+30
    %v316 = vsel %vm308, %v288, -1e+30
    %v317 = vsel %vm309, %v291, -1e+30
    %vm318 = vcmask 130048
    %v319 = vsel %vm318, %v310, -inf
    %320 = vmax.xlane.f32.xlu0 %v319
    %v321 = vpop.xlane.xlu0 %320
    %v322 = vsel %vm318, %v311, -inf
    %323 = vmax.xlane.f32.xlu0 %v322
    %v324 = vpop.xlane.xlu0 %323
    %v325 = vsel %vm318, %v312, -inf
    %326 = vmax.xlane.f32.xlu0 %v325
    %v327 = vpop.xlane.xlu0 %326
    %v328 = vsel %vm318, %v313, -inf
    %329 = vmax.xlane.f32.xlu0 %v328
    %v330 = vpop.xlane.xlu0 %329
    %v331 = vsel %vm318, %v314, -inf
    %332 = vmax.xlane.f32.xlu0 %v331
    %v333 = vpop.xlane.xlu0 %332
    %v334 = vsel %vm318, %v315, -inf
    %335 = vmax.xlane.f32.xlu0 %v334
    %v336 = vpop.xlane.xlu0 %335
    %v337 = vsel %vm318, %v316, -inf
    %338 = vmax.xlane.f32.xlu0 %v337
    %v339 = vpop.xlane.xlu0 %338
    %v340 = vsel %vm318, %v317, -inf
    %341 = vmax.xlane.f32.xlu0 %v340
    %v342 = vpop.xlane.xlu0 %341
    %v343 = vsub.f32 %v310, %v321
    %v344 = vsub.f32 %v311, %v324
    %v345 = vsub.f32 %v312, %v327
    %v346 = vsub.f32 %v313, %v330
    %v347 = vsub.f32 %v314, %v333
    %v348 = vsub.f32 %v315, %v336
    %v349 = vsub.f32 %v316, %v339
    %v350 = vsub.f32 %v317, %v342
    %v351 = vmul.f32 %v343, 1.442695
    %v352 = vpow.pop %v351
    %v353 = vmul.f32 %v344, 1.442695
    %v354 = vpow.pop %v353
    %v355 = vmul.f32 %v345, 1.442695
    %v356 = vpow.pop %v355
    %v357 = vmul.f32 %v346, 1.442695
    %v358 = vpow.pop %v357
    %v359 = vmul.f32 %v347, 1.442695
    %v360 = vpow.pop %v359
    %v361 = vmul.f32 %v348, 1.442695
    %v362 = vpow.pop %v361
    %v363 = vmul.f32 %v349, 1.442695
    %v364 = vpow.pop %v363
    %v365 = vmul.f32 %v350, 1.442695
    %v366 = vpow.pop %v365
    %v367 = vsel %vm318, %v352, 0.0
    %368 = vadd.xlane.f32.xlu0 %v367
    %v369 = vpop.xlane.xlu0 %368
    %v370 = vsel %vm318, %v354, 0.0
    %371 = vadd.xlane.f32.xlu0 %v370
    %v372 = vpop.xlane.xlu0 %371
    %v373 = vsel %vm318, %v356, 0.0
    %374 = vadd.xlane.f32.xlu0 %v373
    %v375 = vpop.xlane.xlu0 %374
    %v376 = vsel %vm318, %v358, 0.0
    %377 = vadd.xlane.f32.xlu0 %v376
    %v378 = vpop.xlane.xlu0 %377
    %v379 = vsel %vm318, %v360, 0.0
    %380 = vadd.xlane.f32.xlu0 %v379
    %v381 = vpop.xlane.xlu0 %380
    %v382 = vsel %vm318, %v362, 0.0
    %383 = vadd.xlane.f32.xlu0 %v382
    %v384 = vpop.xlane.xlu0 %383
    %v385 = vsel %vm318, %v364, 0.0
    %386 = vadd.xlane.f32.xlu0 %v385
    %v387 = vpop.xlane.xlu0 %386
    %v388 = vsel %vm318, %v366, 0.0
    %389 = vadd.xlane.f32.xlu0 %v388
    %v390 = vpop.xlane.xlu0 %389
    %v391 = vrcp.pop %v369
    %v392 = vrcp.pop %v372
    %v393 = vrcp.pop %v375
    %v394 = vrcp.pop %v378
    %v395 = vrcp.pop %v381
    %v396 = vrcp.pop %v384
    %v397 = vrcp.pop %v387
    %v398 = vrcp.pop %v390
    %v399 = vmul.f32 %v352, %v391
    %v400 = vmul.f32 %v354, %v392
    %v401 = vmul.f32 %v356, %v393
    %v402 = vmul.f32 %v358, %v394
    %v403 = vmul.f32 %v360, %v395
    %v404 = vmul.f32 %v362, %v396
    %v405 = vmul.f32 %v364, %v397
    %v406 = vmul.f32 %v366, %v398
    %v407 = vpack.c.bf16 %v400, %v399
    %v408 = vpack.c.bf16 %v402, %v401
    %v409 = vpack.c.bf16 %v404, %v403
    %v410 = vpack.c.bf16 %v406, %v405
    %v411 = vpack.c.bf16 %v142, %v139
    %413 = vrot.lane.b32.xlu0 %v411, 64
    %v414 = vpop.permute.xlu0 %413
    %v417 = vsel %vm318, %v407, 0
    %v420 = vsel %vm318, %v408, 0
    %v423 = vsel %vm318, %v409, 0
    %v426 = vsel %vm318, %v410, 0
    %428 = vmatprep.subr.bf16.mxu0 0
    %429 = vmatpush1.bf16.msra.mxu0 %v414
    %430 = vmatprep.subr.bf16.mxu0 0
    %431 = vmatpush1.bf16.msra.mxu0 0
    %432 = vmatprep.subr.bf16.mxu0 0
    %433 = vmatpush1.bf16.msra.mxu0 0
    %434 = vmatprep.subr.bf16.mxu0 0
    %435 = vmatpush1.bf16.msra.mxu0 0
    %436 = vmatprep.subr.bf16.mxu0 0
    %437 = vmatpush1.bf16.msra.mxu0 0
    %438 = vmatprep.subr.bf16.mxu0 0
    %439 = vmatpush1.bf16.msra.mxu0 0
    %440 = vmatprep.subr.bf16.mxu0 0
    %441 = vmatpush1.bf16.msra.mxu0 0
    %442 = vmatprep.subr.bf16.mxu0 0
    %443 = vmatpush1.bf16.msra.mxu0 0
    %444 = vmatprep.subr.bf16.mxu0 0
    %445 = vmatpush1.bf16.msra.mxu0 0
    %446 = vmatprep.subr.bf16.mxu0 0
    %447 = vmatpush1.bf16.msra.mxu0 0
    %448 = vmatprep.subr.bf16.mxu0 0
    %449 = vmatpush1.bf16.msra.mxu0 0
    %450 = vmatprep.subr.bf16.mxu0 0
    %451 = vmatpush1.bf16.msra.mxu0 0
    %452 = vmatprep.subr.bf16.mxu0 0
    %453 = vmatpush1.bf16.msra.mxu0 0
    %454 = vmatprep.subr.bf16.mxu0 0
    %455 = vmatpush1.bf16.msra.mxu0 0
    %456 = vmatprep.subr.bf16.mxu0 0
    %457 = vmatpush1.bf16.msra.mxu0 0
    %458 = vmatprep.subr.bf16.mxu0 0
    %459 = vmatpush1.bf16.msra.mxu0 0
    %460 = vmatprep.mubr.bf16.mxu0 0
    %461 = vmatmul.mubr.bf16.gmra.mrb[0].mxu0 %v417
    %v462 = vpop.f32.mrb[0].mxu0
    %v463 = vadd.f32 0.0, %v462
    %v464 = vpop.f32.mrb[0].mxu0
    %v465 = vpop.f32.mrb[0].mxu0
    %v466 = vadd.f32 0.0, %v465
    %v467 = vpop.f32.mrb[0].mxu0
    %468 = vmatprep.mubr.bf16.mxu0 0
    %469 = vmatmul.mubr.bf16.gmra.mrb[0].mxu0 %v420
    %v470 = vpop.f32.mrb[0].mxu0
    %v471 = vadd.f32 0.0, %v470
    %v472 = vpop.f32.mrb[0].mxu0
    %v473 = vpop.f32.mrb[0].mxu0
    %v474 = vadd.f32 0.0, %v473
    %v475 = vpop.f32.mrb[0].mxu0
    %476 = vmatprep.mubr.bf16.mxu0 0
    %477 = vmatmul.mubr.bf16.gmra.mrb[0].mxu0 %v423
    %v478 = vpop.f32.mrb[0].mxu0
    %v479 = vadd.f32 0.0, %v478
    %v480 = vpop.f32.mrb[0].mxu0
    %v481 = vpop.f32.mrb[0].mxu0
    %v482 = vadd.f32 0.0, %v481
    %v483 = vpop.f32.mrb[0].mxu0
    %484 = vmatprep.mubr.bf16.mxu0 0
    %485 = vmatmul.mubr.bf16.gmra.mrb[0].mxu0 %v426
    %v486 = vpop.f32.mrb[0].mxu0
    %v487 = vadd.f32 0.0, %v486
    %v488 = vpop.f32.mrb[0].mxu0
    %v489 = vpop.f32.mrb[0].mxu0
    %v490 = vadd.f32 0.0, %v489
    %v491 = vpop.f32.mrb[0].mxu0
    %492 = vdwg.mxu0
    %v493 = vmul.f32 %v463, %v192
    %v494 = vmul.f32 %v466, %v192
    %v495 = vmul.f32 %v471, %v196
    %v496 = vmul.f32 %v474, %v196
    %v497 = vmul.f32 %v479, %v200
    %v498 = vmul.f32 %v482, %v200
    %v499 = vmul.f32 %v487, %v204
    %v500 = vmul.f32 %v490, %v204
    %v501 = vadd.f32 %v493, %v495
    %v502 = vadd.f32 %v494, %v496
    %v503 = vadd.f32 %v501, %v497
    %v504 = vadd.f32 %v502, %v498
    %v505 = vadd.f32 %v503, %v499
    %v506 = vadd.f32 %v504, %v500
    %v507 = vpack.c.bf16 %v506, %v505
    %v508 = vlaneseq
    %v509 = vshrl.u32 %v508, 7
    %v510 = vsub.s32 1, %v509
    %v511 = vrot.slane %v79, %v510
    %v516 = vunpack.c.l.b16 %v63
    %v517 = vunpack.c.l.b16 %v64
    %v518 = vunpack.c.l.b16 %v65
    %v519 = vunpack.c.l.b16 %v66
    %v520 = vpack.c.b16 %v517, %v516
    %v521 = vpack.c.b16 %v519, %v518
    %v525 = vsel %vm100, %v507, 0
    %527 = vmatprep.subr.bf16.mxu0 0
    %528 = vmatpush1.bf16.msra.mxu0 %v520
    %529 = vmatprep.subr.bf16.mxu0 0
    %530 = vmatpush1.bf16.msra.mxu0 %v521
    %531 = vmatprep.subr.bf16.mxu0 0
    %532 = vmatpush1.bf16.msra.mxu0 0
    %533 = vmatprep.subr.bf16.mxu0 0
    %534 = vmatpush1.bf16.msra.mxu0 0
    %535 = vmatprep.subr.bf16.mxu0 0
    %536 = vmatpush1.bf16.msra.mxu0 0
    %537 = vmatprep.subr.bf16.mxu0 0
    %538 = vmatpush1.bf16.msra.mxu0 0
    %539 = vmatprep.subr.bf16.mxu0 0
    %540 = vmatpush1.bf16.msra.mxu0 0
    %541 = vmatprep.subr.bf16.mxu0 0
    %542 = vmatpush1.bf16.msra.mxu0 0
    %543 = vmatprep.subr.bf16.mxu0 0
    %544 = vmatpush1.bf16.msra.mxu0 0
    %545 = vmatprep.subr.bf16.mxu0 0
    %546 = vmatpush1.bf16.msra.mxu0 0
    %547 = vmatprep.subr.bf16.mxu0 0
    %548 = vmatpush1.bf16.msra.mxu0 0
    %549 = vmatprep.subr.bf16.mxu0 0
    %550 = vmatpush1.bf16.msra.mxu0 0
    %551 = vmatprep.subr.bf16.mxu0 0
    %552 = vmatpush1.bf16.msra.mxu0 0
    %553 = vmatprep.subr.bf16.mxu0 0
    %554 = vmatpush1.bf16.msra.mxu0 0
    %555 = vmatprep.subr.bf16.mxu0 0
    %556 = vmatpush1.bf16.msra.mxu0 0
    %557 = vmatprep.subr.bf16.mxu0 0
    %558 = vmatpush1.bf16.msra.mxu0 0
    %559 = vmatprep.mubr.bf16.mxu0 0
    %560 = vmatmul.mubr.bf16.gmra.mrb[0].mxu0 %v525
    %v561 = vpop.f32.mrb[0].mxu0
    %v562 = vadd.f32 %v511, %v561
    %v563 = vpop.f32.mrb[0].mxu0
    %v564 = vpop.f32.mrb[0].mxu0
    %v565 = vadd.f32 %v511, %v564
    %v566 = vpop.f32.mrb[0].mxu0
    %567 = vdwg.mxu0
    %v568 = vadd.f32 %v57, %v562
    %v569 = vadd.f32 %v58, %v565
    %v570 = vsel %vm100, %v568, 0.0
    %571 = vadd.xlane.f32.xlu0 %v570
    %v572 = vpop.xlane.xlu0 %571
    %v573 = vsel %vm100, %v569, 0.0
    %574 = vadd.xlane.f32.xlu0 %v573
    %v575 = vpop.xlane.xlu0 %574
    %v576 = vrcp.pop 32.0
    %v577 = vmul.f32 %v572, %v576
    %v578 = vmul.f32 %v575, %v576
    %v579 = vsub.f32 %v568, %v577
    %v580 = vsub.f32 %v569, %v578
    %v581 = vmul.f32 %v579, %v579
    %v582 = vmul.f32 %v580, %v580
    %v583 = vsel %vm100, %v581, 0.0
    %584 = vadd.xlane.f32.xlu0 %v583
    %v585 = vpop.xlane.xlu0 %584
    %v586 = vsel %vm100, %v582, 0.0
    %587 = vadd.xlane.f32.xlu0 %v586
    %v588 = vpop.xlane.xlu0 %587
    %v589 = vmul.f32 %v585, %v576
    %v590 = vmul.f32 %v588, %v576
    %v591 = vadd.f32 %v589, 1e-05
    %v592 = vadd.f32 %v590, 1e-05
    %v593 = vrsqrt.pop %v591
    %v594 = vrsqrt.pop %v592
    %v595 = vmul.f32 %v579, %v593
    %v596 = vmul.f32 %v580, %v594
    %v597 = vlaneseq
    %v598 = vshrl.u32 %v597, 7
    %v599 = vsub.s32 2, %v598
    %v600 = vrot.slane %v79, %v599
    %v601 = vmul.f32 %v595, %v600
    %v602 = vmul.f32 %v596, %v600
    %v603 = vlaneseq
    %v604 = vshrl.u32 %v603, 7
    %v605 = vsub.s32 3, %v604
    %v606 = vrot.slane %v79, %v605
    %v607 = vadd.f32 %v601, %v606
    %v608 = vadd.f32 %v602, %v606
    %v609 = vpack.c.bf16 %v608, %v607
    %v610 = vlaneseq
    %v611 = vshrl.u32 %v610, 7
    %v612 = vsub.s32 4, %v611
    %v613 = vrot.slane %v79, %v612
    %v618 = vunpack.c.l.b16 %v67
    %v619 = vunpack.c.l.b16 %v68
    %v620 = vunpack.c.l.b16 %v69
    %v621 = vunpack.c.l.b16 %v70
    %v622 = vpack.c.b16 %v619, %v618
    %v623 = vpack.c.b16 %v621, %v620
    %v627 = vsel %vm100, %v609, 0
    %629 = vmatprep.subr.bf16.mxu0 0
    %630 = vmatpush1.bf16.msra.mxu0 %v622
    %631 = vmatprep.subr.bf16.mxu0 0
    %632 = vmatpush1.bf16.msra.mxu0 %v623
    %633 = vmatprep.subr.bf16.mxu0 0
    %634 = vmatpush1.bf16.msra.mxu0 0
    %635 = vmatprep.subr.bf16.mxu0 0
    %636 = vmatpush1.bf16.msra.mxu0 0
    %637 = vmatprep.subr.bf16.mxu0 0
    %638 = vmatpush1.bf16.msra.mxu0 0
    %639 = vmatprep.subr.bf16.mxu0 0
    %640 = vmatpush1.bf16.msra.mxu0 0
    %641 = vmatprep.subr.bf16.mxu0 0
    %642 = vmatpush1.bf16.msra.mxu0 0
    %643 = vmatprep.subr.bf16.mxu0 0
    %644 = vmatpush1.bf16.msra.mxu0 0
    %645 = vmatprep.subr.bf16.mxu0 0
    %646 = vmatpush1.bf16.msra.mxu0 0
    %647 = vmatprep.subr.bf16.mxu0 0
    %648 = vmatpush1.bf16.msra.mxu0 0
    %649 = vmatprep.subr.bf16.mxu0 0
    %650 = vmatpush1.bf16.msra.mxu0 0
    %651 = vmatprep.subr.bf16.mxu0 0
    %652 = vmatpush1.bf16.msra.mxu0 0
    %653 = vmatprep.subr.bf16.mxu0 0
    %654 = vmatpush1.bf16.msra.mxu0 0
    %655 = vmatprep.subr.bf16.mxu0 0
    %656 = vmatpush1.bf16.msra.mxu0 0
    %657 = vmatprep.subr.bf16.mxu0 0
    %658 = vmatpush1.bf16.msra.mxu0 0
    %659 = vmatprep.subr.bf16.mxu0 0
    %660 = vmatpush1.bf16.msra.mxu0 0
    %661 = vmatprep.mubr.bf16.mxu0 0
    %662 = vmatmul.mubr.bf16.gmra.mrb[0].mxu0 %v627
    %v663 = vpop.f32.mrb[0].mxu0
    %v664 = vadd.f32 %v613, %v663
    %v665 = vpop.f32.mrb[0].mxu0
    %v666 = vpop.f32.mrb[0].mxu0
    %v667 = vadd.f32 %v613, %v666
    %v668 = vpop.f32.mrb[0].mxu0
    %669 = vdwg.mxu0
    %v670 = vmax.f32 %v664, 0.0
    %v671 = vmax.f32 %v667, 0.0
    %v672 = vpack.c.bf16 %v671, %v670
    %v673 = vlaneseq
    %v674 = vshrl.u32 %v673, 7
    %v675 = vsub.s32 5, %v674
    %v676 = vrot.slane %v79, %v675
    %v685 = vunpack.c.l.b16 %v71
    %v686 = vunpack.c.l.b16 %v72
    %v687 = vunpack.c.l.b16 %v73
    %v688 = vunpack.c.l.b16 %v74
    %v689 = vunpack.c.l.b16 %v75
    %v690 = vunpack.c.l.b16 %v76
    %v691 = vunpack.c.l.b16 %v77
    %v692 = vunpack.c.l.b16 %v78
    %v693 = vpack.c.b16 %v686, %v685
    %v694 = vpack.c.b16 %v688, %v687
    %v695 = vpack.c.b16 %v690, %v689
    %v696 = vpack.c.b16 %v692, %v691
    %vm701 = vcmask 523264
    %v703 = vsel %vm701, %v672, 0
    %705 = vmatprep.subr.bf16.mxu0 0
    %706 = vmatpush1.bf16.msra.mxu0 %v693
    %707 = vmatprep.subr.bf16.mxu0 0
    %708 = vmatpush1.bf16.msra.mxu0 %v694
    %709 = vmatprep.subr.bf16.mxu0 0
    %710 = vmatpush1.bf16.msra.mxu0 %v695
    %711 = vmatprep.subr.bf16.mxu0 0
    %712 = vmatpush1.bf16.msra.mxu0 %v696
    %713 = vmatprep.subr.bf16.mxu0 0
    %714 = vmatpush1.bf16.msra.mxu0 0
    %715 = vmatprep.subr.bf16.mxu0 0
    %716 = vmatpush1.bf16.msra.mxu0 0
    %717 = vmatprep.subr.bf16.mxu0 0
    %718 = vmatpush1.bf16.msra.mxu0 0
    %719 = vmatprep.subr.bf16.mxu0 0
    %720 = vmatpush1.bf16.msra.mxu0 0
    %721 = vmatprep.subr.bf16.mxu0 0
    %722 = vmatpush1.bf16.msra.mxu0 0
    %723 = vmatprep.subr.bf16.mxu0 0
    %724 = vmatpush1.bf16.msra.mxu0 0
    %725 = vmatprep.subr.bf16.mxu0 0
    %726 = vmatpush1.bf16.msra.mxu0 0
    %727 = vmatprep.subr.bf16.mxu0 0
    %728 = vmatpush1.bf16.msra.mxu0 0
    %729 = vmatprep.subr.bf16.mxu0 0
    %730 = vmatpush1.bf16.msra.mxu0 0
    %731 = vmatprep.subr.bf16.mxu0 0
    %732 = vmatpush1.bf16.msra.mxu0 0
    %733 = vmatprep.subr.bf16.mxu0 0
    %734 = vmatpush1.bf16.msra.mxu0 0
    %735 = vmatprep.subr.bf16.mxu0 0
    %736 = vmatpush1.bf16.msra.mxu0 0
    %737 = vmatprep.mubr.bf16.mxu0 0
    %738 = vmatmul.mubr.bf16.gmra.mrb[0].mxu0 %v703
    %v739 = vpop.f32.mrb[0].mxu0
    %v740 = vadd.f32 %v676, %v739
    %v741 = vpop.f32.mrb[0].mxu0
    %v742 = vpop.f32.mrb[0].mxu0
    %v743 = vadd.f32 %v676, %v742
    %v744 = vpop.f32.mrb[0].mxu0
    %745 = vdwg.mxu0
    %v746 = vadd.f32 %v607, %v740
    %v747 = vadd.f32 %v608, %v743
    %v748 = vsel %vm100, %v746, 0.0
    %749 = vadd.xlane.f32.xlu0 %v748
    %v750 = vpop.xlane.xlu0 %749
    %v751 = vsel %vm100, %v747, 0.0
    %752 = vadd.xlane.f32.xlu0 %v751
    %v753 = vpop.xlane.xlu0 %752
    %v754 = vmul.f32 %v750, %v576
    %v755 = vmul.f32 %v753, %v576
    %v756 = vsub.f32 %v746, %v754
    %v757 = vsub.f32 %v747, %v755
    %v758 = vmul.f32 %v756, %v756
    %v759 = vmul.f32 %v757, %v757
    %v760 = vsel %vm100, %v758, 0.0
    %761 = vadd.xlane.f32.xlu0 %v760
    %v762 = vpop.xlane.xlu0 %761
    %v763 = vsel %vm100, %v759, 0.0
    %764 = vadd.xlane.f32.xlu0 %v763
    %v765 = vpop.xlane.xlu0 %764
    %v766 = vmul.f32 %v762, %v576
    %v767 = vmul.f32 %v765, %v576
    %v768 = vadd.f32 %v766, 1e-05
    %v769 = vadd.f32 %v767, 1e-05
    %v770 = vrsqrt.pop %v768
    %v771 = vrsqrt.pop %v769
    %v772 = vmul.f32 %v756, %v770
    %v773 = vmul.f32 %v757, %v771
    %v774 = vlaneseq
    %v775 = vshrl.u32 %v774, 7
    %v776 = vsub.s32 6, %v775
    %v777 = vrot.slane %v79, %v776
    %v778 = vmul.f32 %v772, %v777
    %v779 = vmul.f32 %v773, %v777
    %v780 = vlaneseq
    %v781 = vshrl.u32 %v780, 7
    %v782 = vsub.s32 7, %v781
    %v783 = vrot.slane %v79, %v782
    %v784 = vadd.f32 %v778, %v783
    %v785 = vadd.f32 %v779, %v783
    %786 = vst.msk [vmem:[#allocation8] sm:$0xff] %vm100, %v784
    %787 = vst.msk [vmem:[#allocation8 + $0x8] sm:$0xff] %vm100, %v785
    // Predicated region
    $region26: #{johns_nn_forward.1} parent=1 // pred_check
      _
    $region27: #{johns_nn_forward.1} parent=1 // pred_check_branch
      %789 = sbr.rel (0) target = $region29
    $region28: #{johns_nn_forward.1} parent=1 // pred_region
      %s791 = ssub.s32 256, 256
      %792 = vsyncadd [#allocation4], %s791
      %s793 = sshll.u32 [#allocation8], 4
      %s794 = int_to_ptr.vmem [resolvable:$true] %s793
      %799 = dma.vmem_to_hbm [thread:$0]  %s794, 256, %s3, [#allocation4], 128, 128, 8
    $region29: #{johns_nn_forward.1} parent=1 // pred_fallthru
      _
    // Predicated region
    $region30: #{johns_nn_forward.1} parent=1 // pred_check
      _
    $region31: #{johns_nn_forward.1} parent=1 // pred_check_branch
      %801 = sbr.rel (0) target = $region33
    $region32: #{johns_nn_forward.1} parent=1 // pred_region
      %802 = dma.done [#allocation4], 256
    $region33: #{johns_nn_forward.1} parent=1 // pred_fallthru
      _
    %803 = vsyncpa [#allocation3], 1
    %804 = vsyncpa [#allocation6], 1
    %805 = vsyncpa [#allocation4], 1

</llo_original>
